<compile_context>
chip_gen: v7x
topology: tpu7x:2x2x1
jax: 0.10.0
libtpu: 0.0.40
codegen_flags: <defaults>
</compile_context>

<pallas_src>
import functools

import jax
import jax.numpy as jnp
from jax.experimental import pallas as pl
from jax.experimental.pallas import tpu as pltpu


# ------------------------------ chip queries ------------------------------ #
def _round_up(x, m):
    return ((x + m - 1) // m) * m


def _cdiv(a, b):
    return (a + b - 1) // b


def _device_kind():
    try:
        return jax.devices()[0].device_kind.lower()
    except Exception:
        return ""


def _vmem_capacity_bytes():
    try:
        return int(pltpu.get_tpu_info().vmem_capacity_bytes)
    except Exception:
        kind = _device_kind()
        if "v7" in kind or "7x" in kind:
            return 64 * 1024 * 1024
        if any(t in kind for t in ("v4", "v5", "v6")):
            return 128 * 1024 * 1024
        return 64 * 1024 * 1024  # conservative default


def _num_tensorcores():
    kind = _device_kind()
    # v7x: 2 TensorCores per chip. v4/v5p: megacore that "parallel" axes split.
    if "v7" in kind or "7x" in kind:
        return 2
    if "v4" in kind or "v5p" in kind:
        return 2
    return 1  # v5e / v6e: single TensorCore


def _sublane_min(dtype):
    itemsize = jnp.dtype(dtype).itemsize
    if itemsize >= 4:
        return 8
    if itemsize == 2:
        return 16
    return 32


# ----------------------- Path A: fused single pass ----------------------- #
def _norm_fused_kernel(x_ref, o_ref, *, eps):
    # x_ref: (row_tile, S). Last block dim equals the full spatial extent, so
    # there is no column padding. Rows past the array end (partial edge block)
    # produce garbage stats, but their writes are dropped by Pallas.
    x = x_ref[...].astype(jnp.float32)
    inv_s = 1.0 / x.shape[-1]
    mean = jnp.sum(x, axis=-1, keepdims=True) * inv_s
    centered = x - mean
    # True two-pass variance: free (kernel is HBM-bound), avoids cancellation.
    var = jnp.sum(centered * centered, axis=-1, keepdims=True) * inv_s
    inv = jax.lax.rsqrt(var + eps)
    o_ref[...] = (centered * inv).astype(o_ref.dtype)


# --------------- Path B: spatial-tiled, fused stats + apply --------------- #
def _norm_tiled_kernel(x_ref, o_ref, sum_acc, sq_acc, mean_sc, inv_sc, *,
                       eps, s_true, s_tile, k_steps):
    # Grid axis 1 has 2*k_steps steps: [0, k_steps) accumulate statistics,
    # [k_steps, 2*k_steps) normalize and write. The input index_map revisits
    # column tiles (k % k_steps); the output index_map stays on column 0
    # during the stats phase so nothing is flushed before it is written.
    k = pl.program_id(1)

    @pl.when(k == 0)
    def _():
        sum_acc[...] = jnp.zeros_like(sum_acc)
        sq_acc[...] = jnp.zeros_like(sq_acc)

    @pl.when(k < k_steps)
    def _():
        x = x_ref[...].astype(jnp.float32)
        # Mask the ragged tail of the last column tile (no input padding).
        col = jax.lax.broadcasted_iota(jnp.int32, x.shape, 1)
        x = jnp.where(k * s_tile + col < s_true, x, 0.0)
        sum_acc[...] += jnp.sum(x, axis=-1, keepdims=True)
        sq_acc[...] += jnp.sum(x * x, axis=-1, keepdims=True)

    @pl.when(k == k_steps)
    def _():
        inv_s = 1.0 / float(s_true)
        mean = sum_acc[...] * inv_s
        var = jnp.maximum(sq_acc[...] * inv_s - mean * mean, 0.0)
        mean_sc[...] = mean
        inv_sc[...] = jax.lax.rsqrt(var + eps)

    @pl.when(k >= k_steps)
    def _():
        x = x_ref[...].astype(jnp.float32)
        o_ref[...] = ((x - mean_sc[...]) * inv_sc[...]).astype(o_ref.dtype)


# -------------------------------- wrapper --------------------------------- #
def instance_norm(x, eps=1e-5, *, _vmem_budget_bytes=None):
    """InstanceNorm over an NC[spatial...] array (no affine params)."""
    n, c = x.shape[0], x.shape[1]
    s = 1
    for d in x.shape[2:]:
        s *= d
    nc = n * c

    dtype = x.dtype
    itemsize = jnp.dtype(dtype).itemsize
    sub = _sublane_min(dtype)
    num_cores = _num_tensorcores()

    # Per-element VMEM footprint: double-buffered input + double-buffered
    # output + allowance for f32 intermediates in the body.
    per_elem = 4 * itemsize + 8

    vmem_cap = _vmem_capacity_bytes()
    vmem_limit = int(min(0.9 * vmem_cap, 128 * 1024 * 1024))
    budget = (int(_vmem_budget_bytes) if _vmem_budget_bytes is not None
              else int(0.65 * vmem_limit))

    s_vmem = _round_up(s, 128)  # VMEM footprint estimate only; no padding
    x2 = x.reshape(nc, s)

    base_rows = min(nc, sub)
    if base_rows * s_vmem * per_elem <= budget:
        # ---------------- Path A: fused single pass, full rows ----------------
        max_rows = budget // (s_vmem * per_elem)
        if num_cores > 1 and nc > sub:
            # Load-balance the TensorCores (aim for ~4 blocks per core) but
            # keep blocks >= ~2 MiB so per-step pipeline overhead stays hidden.
            want = _cdiv(nc, 4 * num_cores)
            min_rows = _cdiv(2 * 1024 * 1024, s_vmem * itemsize)
            if want < min_rows:
                want = min(min_rows, _cdiv(nc, num_cores))
        else:
            want = nc  # single TC: biggest block the budget allows
        row_tile = min(nc, want, max_rows)
        if row_tile < nc:
            row_tile = max(sub, (row_tile // sub) * sub)
        grid = (_cdiv(nc, row_tile),)

        out2 = pl.pallas_call(
            functools.partial(_norm_fused_kernel, eps=eps),
            out_shape=jax.ShapeDtypeStruct((nc, s), dtype),
            grid_spec=pltpu.PrefetchScalarGridSpec(
                num_scalar_prefetch=0,
                grid=grid,
                in_specs=[pl.BlockSpec((row_tile, s), lambda i: (i, 0))],
                out_specs=pl.BlockSpec((row_tile, s), lambda i: (i, 0)),
            ),
            compiler_params=pltpu.CompilerParams(
                dimension_semantics=("parallel",),
                vmem_limit_bytes=vmem_limit,
            ),
            cost_estimate=pl.CostEstimate(
                flops=7 * nc * s,
                transcendentals=nc,
                bytes_accessed=2 * nc * s * itemsize,
            ),
        )(x2)
    else:
        # ------ Path B: spatial-tiled, single fused stats+normalize call ------
        s_tile = max(128, min(
            s_vmem, ((budget // (max(base_rows, 1) * per_elem)) // 128) * 128))
        k_steps = _cdiv(s, s_tile)
        max_rows = max(1, budget // (s_tile * per_elem))
        if nc <= sub:
            row_tile = nc
        else:
            row_tile = max(sub, (min(nc, max_rows) // sub) * sub)
        grid = (_cdiv(nc, row_tile), 2 * k_steps)

        out2 = pl.pallas_call(
            functools.partial(_norm_tiled_kernel, eps=eps, s_true=s,
                              s_tile=s_tile, k_steps=k_steps),
            out_shape=jax.ShapeDtypeStruct((nc, s), dtype),
            grid_spec=pltpu.PrefetchScalarGridSpec(
                num_scalar_prefetch=0,
                grid=grid,
                in_specs=[pl.BlockSpec((row_tile, s_tile),
                                       lambda i, k: (i, k % k_steps))],
                out_specs=pl.BlockSpec(
                    (row_tile, s_tile),
                    lambda i, k: (i, jnp.maximum(k - k_steps, 0))),
                scratch_shapes=[pltpu.VMEM((row_tile, 1), jnp.float32),
                                pltpu.VMEM((row_tile, 1), jnp.float32),
                                pltpu.VMEM((row_tile, 1), jnp.float32),
                                pltpu.VMEM((row_tile, 1), jnp.float32)],
            ),
            compiler_params=pltpu.CompilerParams(
                dimension_semantics=("parallel", "arbitrary"),
                vmem_limit_bytes=vmem_limit,
            ),
            cost_estimate=pl.CostEstimate(
                flops=5 * nc * s,
                transcendentals=nc,
                bytes_accessed=3 * nc * s * itemsize,
            ),
        )(x2)

    return out2.reshape(x.shape)


def _reference_instance_norm(x, eps=1e-5):
    axes = tuple(range(2, x.ndim))
    xf = x.astype(jnp.float32)
    mean = jnp.mean(xf, axis=axes, keepdims=True)
    var = jnp.mean((xf - mean) ** 2, axis=axes, keepdims=True)
    return ((xf - mean) * jax.lax.rsqrt(var + eps)).astype(x.dtype)


if __name__ == "__main__":
    key = jax.random.PRNGKey(0)

    # InstanceNorm2d(4): spatial_dims=2, in_channels=4 (no learnable params).
    x2d = jax.random.normal(key, (2, 4, 16, 16), dtype=jnp.float32)
    out = jax.block_until_ready(instance_norm(x2d))
    ref = _reference_instance_norm(x2d)
    assert out.shape == x2d.shape
    assert jnp.max(jnp.abs(out - ref)) < 1e-4

    # InstanceNorm3d(3): N*C = 3 < sublane min -> full-dim row block.
    x3d = jax.random.normal(jax.random.PRNGKey(1), (1, 3, 4, 8, 16),
                            dtype=jnp.float32)
    out3 = jax.block_until_ready(instance_norm(x3d))
    ref3 = _reference_instance_norm(x3d)
    assert out3.shape == x3d.shape
    assert jnp.max(jnp.abs(out3 - ref3)) < 1e-4

    # bf16: exercises the 16-row sublane minimum (nc=8 -> full-dim row block).
    xbf = jax.random.normal(jax.random.PRNGKey(2), (2, 4, 16, 16),
                            dtype=jnp.bfloat16)
    outb = jax.block_until_ready(instance_norm(xbf))
    refb = _reference_instance_norm(xbf)
    assert outb.shape == xbf.shape
    assert jnp.max(jnp.abs(outb.astype(jnp.float32)
                           - refb.astype(jnp.float32))) < 5e-2

    # Ragged spatial extent (S=100, not a multiple of 128): no padding needed.
    xr = jax.random.normal(jax.random.PRNGKey(3), (2, 4, 10, 10),
                           dtype=jnp.float32)
    outr = jax.block_until_ready(instance_norm(xr))
    assert jnp.max(jnp.abs(outr - _reference_instance_norm(xr))) < 1e-4

    # Partial row edge block: nc=12 with a budget forcing row_tile=8 (Path A).
    xe = jax.random.normal(jax.random.PRNGKey(4), (2, 6, 16, 16),
                           dtype=jnp.float32)
    oute = jax.block_until_ready(instance_norm(xe, _vmem_budget_bytes=50000))
    assert jnp.max(jnp.abs(oute - _reference_instance_norm(xe))) < 1e-4

    # Spatial-tiled Path B with a ragged last column tile (S=200, tile=128).
    xpb = jax.random.normal(jax.random.PRNGKey(5), (1, 4, 10, 20),
                            dtype=jnp.float32)
    outpb = jax.block_until_ready(instance_norm(xpb, _vmem_budget_bytes=16384))
    assert jnp.max(jnp.abs(outpb - _reference_instance_norm(xpb))) < 1e-4

    # Path B forced on the 2D input as well (column-exact case).
    outB = jax.block_until_ready(instance_norm(x2d, _vmem_budget_bytes=32768))
    assert jnp.max(jnp.abs(outB - ref)) < 1e-4

    print("KERNEL_OK")
</pallas_src>

<mosaic_0001>
module attributes {stable_mosaic.version = 11 : i64} {
  func.func @_norm_fused_kernel(%arg0: i32, %arg1: memref<8x256xf32, #tpu.memory_space<vmem>>, %arg2: memref<8x256xf32, #tpu.memory_space<vmem>>) attributes {dimension_semantics = [#tpu.dimension_semantics<parallel>], iteration_bounds = array<i64: 1>, scalar_prefetch = 0 : i64, scratch_operands = 0 : i64, tpu.core_type = #tpu.core_type<tc>, window_params = [{transform_indices = @transform_0, window_bounds = array<i64: 8, 256>}, {transform_indices = @transform_1, window_bounds = array<i64: 8, 256>}]} {
    %c0 = arith.constant 0 : index
    %c0_0 = arith.constant 0 : index
    %0 = vector.load %arg1[%c0, %c0_0] : memref<8x256xf32, #tpu.memory_space<vmem>>, vector<8x256xf32>
    %cst = arith.constant dense<0.000000e+00> : vector<8xf32>
    %1 = vector.multi_reduction <add>, %0, %cst [1] : vector<8x256xf32> to vector<8xf32>
    %2 = vector.shape_cast %1 : vector<8xf32> to vector<8x1xf32>
    %cst_1 = arith.constant 3.906250e-03 : f32
    %3 = vector.broadcast %cst_1 : f32 to vector<8x1xf32>
    %4 = arith.mulf %2, %3 : vector<8x1xf32>
    %5 = vector.broadcast %4 : vector<8x1xf32> to vector<8x256xf32>
    %6 = arith.subf %0, %5 : vector<8x256xf32>
    %7 = arith.mulf %6, %6 : vector<8x256xf32>
    %cst_2 = arith.constant dense<0.000000e+00> : vector<8xf32>
    %8 = vector.multi_reduction <add>, %7, %cst_2 [1] : vector<8x256xf32> to vector<8xf32>
    %9 = vector.shape_cast %8 : vector<8xf32> to vector<8x1xf32>
    %cst_3 = arith.constant 3.906250e-03 : f32
    %10 = vector.broadcast %cst_3 : f32 to vector<8x1xf32>
    %11 = arith.mulf %9, %10 : vector<8x1xf32>
    %cst_4 = arith.constant 9.99999974E-6 : f32
    %12 = vector.broadcast %cst_4 : f32 to vector<8x1xf32>
    %13 = arith.addf %11, %12 : vector<8x1xf32>
    %14 = math.rsqrt %13 : vector<8x1xf32>
    %15 = vector.broadcast %14 : vector<8x1xf32> to vector<8x256xf32>
    %16 = arith.mulf %6, %15 : vector<8x256xf32>
    %c0_5 = arith.constant 0 : index
    %c0_6 = arith.constant 0 : index
    %17 = vector.load %arg2[%c0_5, %c0_6] : memref<8x256xf32, #tpu.memory_space<vmem>>, vector<8x256xf32>
    tpu.vector_store %arg2[%c0_5, %c0_6], %16 {strides = array<i32>} : memref<8x256xf32, #tpu.memory_space<vmem>>, vector<8x256xf32>,
    return
  }
  func.func @transform_0(%arg0: i32) -> (i32, i32) {
    %c0_i32 = arith.constant 0 : i32
    %c0_i32_0 = arith.constant 0 : i32
    return %arg0, %c0_i32 : i32, i32
  }
  func.func @transform_1(%arg0: i32) -> (i32, i32) {
    %c0_i32 = arith.constant 0 : i32
    %c0_i32_0 = arith.constant 0 : i32
    return %arg0, %c0_i32 : i32, i32
  }
}

</mosaic_0001>

<llo_original>
// kernel: tpu_custom_call.1
$region0: #{tpu_custom_call.1}
  #allocation0 [shape = 'u32[]', space=smem, size = 0x4, offset = 0x4, fixed_abs, tag = 'smem constant byte address 0x4 - core index']
  #allocation1 [shape = 'u32[144,128]{1,0:T(1,128)}', space=vmem, size = 0x12000, scoped, tag = 'internal scratch']
  %s0 = inlined_call_operand.hbm [shape: f32[8,256], index: 0, kind: input, shape index: {}]
  %s1 = inlined_call_operand.hbm [shape: f32[8,256], index: 1, kind: output, shape index: {}]
  %s2 = sld [smem:[#allocation0]]
  $region18: #{tpu_custom_call.1} parent=0
    _
  %s4 = ssub.s32 1, %s2
  %s5 = scalar_select 0, %s4, %s2
  $region1: #{tpu_custom_call.1} parent=0
    #allocation2 [shape = 'u8[8192]{0}', space=vmem, size = 0x2000, scoped, tag = 'input window, operand 0, single buffered']
    #allocation3 [shape = 's32[1]{0}', space=sflag, size = 0x4, scoped, tag = 'scoped memory for tpu_custom_call.1']
    #allocation4 [shape = 's32[1]{0}', space=sflag, size = 0x4, scoped, tag = 'scoped memory for tpu_custom_call.1']
    #allocation5 [shape = 'u8[8192]{0}', space=vmem, size = 0x2000, scoped, tag = 'output window, operand 0, single buffered']
    %6 = vsyncpa [#allocation3], 0
    %7 = vsyncpa [#allocation4], 0
    // Predicated region
    $region2: #{tpu_custom_call.1} parent=1 // pred_check
      _
    $region3: #{tpu_custom_call.1} parent=1 // pred_check_branch
      %9 = sbr.rel (0) target = $region5
    $region4: #{tpu_custom_call.1} parent=1 // pred_region
      %s11 = ssub.s32 256, 256
      %12 = vsyncadd [#allocation3], %s11
      %s14 = sshll.u32 [#allocation2], 4
      %s15 = int_to_ptr.vmem [resolvable:$true] %s14
      %17 = dma.hbm_to_vmem [thread:$0]  %s0, 256, %s15, [#allocation3]
    $region5: #{tpu_custom_call.1} parent=1 // pred_fallthru
      _
    // Predicated region
    $region6: #{tpu_custom_call.1} parent=1 // pred_check
      _
    $region7: #{tpu_custom_call.1} parent=1 // pred_check_branch
      %19 = sbr.rel (0) target = $region9
    $region8: #{tpu_custom_call.1} parent=1 // pred_region
      %20 = dma.done [#allocation3], 256
    $region9: #{tpu_custom_call.1} parent=1 // pred_fallthru
      _
    %v21 = vld [vmem:[#allocation2] sm:$0xff]
    %v22 = vld [vmem:[#allocation2 + $0x8] sm:$0xff]
    %v23 = vadd.f32 %v21, %v22
    %24 = vadd.xlane.f32.xlu0 %v23
    %v25 = vpop.xlane.xlu0 %24
    %v26 = vmul.f32 %v25, 0.00390625
    %v27 = vsub.f32 %v21, %v26
    %v28 = vsub.f32 %v22, %v26
    %v29 = vmul.f32 %v27, %v27
    %v30 = vmul.f32 %v28, %v28
    %v31 = vadd.f32 %v29, %v30
    %32 = vadd.xlane.f32.xlu0 %v31
    %v33 = vpop.xlane.xlu0 %32
    %v34 = vmul.f32 %v33, 0.00390625
    %v35 = vadd.f32 %v34, 1e-05
    %v36 = vrsqrt.pop %v35
    %v37 = vmul.f32 %v27, %v36
    %v38 = vmul.f32 %v28, %v36
    %39 = vst [vmem:[#allocation5] sm:$0xff] %v37
    %40 = vst [vmem:[#allocation5 + $0x8] sm:$0xff] %v38
    // Predicated region
    $region10: #{tpu_custom_call.1} parent=1 // pred_check
      _
    $region11: #{tpu_custom_call.1} parent=1 // pred_check_branch
      %42 = sbr.rel (0) target = $region13
    $region12: #{tpu_custom_call.1} parent=1 // pred_region
      %s44 = ssub.s32 256, 256
      %45 = vsyncadd [#allocation4], %s44
      %s47 = sshll.u32 [#allocation5], 4
      %s48 = int_to_ptr.vmem [resolvable:$true] %s47
      %50 = dma.vmem_to_hbm [thread:$0]  %s48, 256, %s1, [#allocation4]
    $region13: #{tpu_custom_call.1} parent=1 // pred_fallthru
      _
    // Predicated region
    $region14: #{tpu_custom_call.1} parent=1 // pred_check
      _
    $region15: #{tpu_custom_call.1} parent=1 // pred_check_branch
      %52 = sbr.rel (0) target = $region17
    $region16: #{tpu_custom_call.1} parent=1 // pred_region
      %53 = dma.done [#allocation4], 256
    $region17: #{tpu_custom_call.1} parent=1 // pred_fallthru
      _
    %54 = vsyncpa [#allocation3], 1
    %55 = vsyncpa [#allocation4], 1

</llo_original>
